<compile_context>
chip_gen: v5e
topology: v5e:2x2
jax: 0.10.0
libtpu: 0.0.40
codegen_flags: <defaults>
</compile_context>

<pallas_src>
import jax
import jax.numpy as jnp
from jax import lax
from jax.experimental import pallas as pl
from jax.experimental.pallas import tpu as pltpu


def kan_fused_kernel(x_ref, w_in_ref, b_in_ref, w_stack_ref, b_stack_ref,
                     w_out_ref, b_out_ref, o_ref):
    # Input layer: h = tanh(x @ W_in^T + b_in).  MXU matmul with f32
    # accumulation; bias + tanh epilogue in f32; h kept in compute dtype.
    h = lax.dot_general(
        x_ref[...], w_in_ref[...],
        dimension_numbers=(((1,), (1,)), ((), ())),
        preferred_element_type=jnp.float32)
    h = jnp.tanh(h + b_in_ref[...]).astype(x_ref.dtype)

    # All N inner KANLayers as ONE stacked matmul:
    # Z = tanh(h @ W_stack^T + b_stack), Z has the (padded) concat layout.
    z = lax.dot_general(
        h, w_stack_ref[...],
        dimension_numbers=(((1,), (1,)), ((), ())),
        preferred_element_type=jnp.float32)
    z = jnp.tanh(z + b_stack_ref[...]).astype(x_ref.dtype)

    # Output Linear over the full concatenated width: out = Z @ W_out^T + b_out.
    out = lax.dot_general(
        z, w_out_ref[...],
        dimension_numbers=(((1,), (1,)), ((), ())),
        preferred_element_type=jnp.float32)
    o_ref[...] = (out + b_out_ref[...]).astype(o_ref.dtype)


def _round_up(n, m):
    return ((n + m - 1) // m) * m


def _pad_to(a, shape):
    return jnp.pad(a, [(0, t - s) for s, t in zip(a.shape, shape)])


def kan_prepare_params(w_in, b_in, w_inner, b_inner, w_out, b_out,
                       *, compute_dtype=jnp.float32):
    """One-time (init-time) weight prep: pad, cast, and remap layouts.

    w_in:    (H, D)      PyTorch nn.Linear layout (out, in)
    b_in:    (H,)
    w_inner: (N, H, H)   stacked inner KANLayer weights
    b_inner: (N, H)
    w_out:   (O, N*H)
    b_out:   (O,)
    """
    H, D = w_in.shape
    N = w_inner.shape[0]
    O = w_out.shape[0]
    Dp, Hp, Op = _round_up(D, 128), _round_up(H, 128), _round_up(O, 128)
    NHp = N * Hp

    w_in_p = _pad_to(w_in, (Hp, Dp)).astype(compute_dtype)
    b_in_p = _pad_to(b_in.reshape(1, H), (1, Hp)).astype(jnp.float32)

    # Stacked inner weights: (N, H, H) -> pad -> (N*Hp, Hp).  Row block i holds
    # inner function i, so h @ W_stack^T reproduces the concat column layout.
    w_stack_p = _pad_to(w_inner, (N, Hp, Hp)).reshape(NHp, Hp).astype(compute_dtype)
    b_stack_p = _pad_to(b_inner, (N, Hp)).reshape(1, NHp).astype(jnp.float32)

    # Output weight columns remapped to the padded concat layout:
    # (O, N*H) -> (O, N, H) -> pad last dim -> (O, N*Hp) -> pad rows -> (Op, NHp).
    w_out_r = _pad_to(w_out.reshape(O, N, H), (O, N, Hp)).reshape(O, NHp)
    w_out_p = _pad_to(w_out_r, (Op, NHp)).astype(compute_dtype)
    b_out_p = _pad_to(b_out.reshape(1, O), (1, Op)).astype(jnp.float32)

    meta = dict(D=D, H=H, N=N, O=O, Dp=Dp, Hp=Hp, Op=Op, NHp=NHp,
                compute_dtype=compute_dtype)
    return (w_in_p, b_in_p, w_stack_p, b_stack_p, w_out_p, b_out_p), meta


def kan_forward_prepared(x, params, meta, *, block_batch=256):
    """Fused forward using pre-padded params from kan_prepare_params."""
    w_in_p, b_in_p, w_stack_p, b_stack_p, w_out_p, b_out_p = params
    D, O = meta["D"], meta["O"]
    Dp, Hp, Op, NHp = meta["Dp"], meta["Hp"], meta["Op"], meta["NHp"]
    compute_dtype = meta["compute_dtype"]

    B = x.shape[0]
    assert x.shape[1] == D

    # Batch tile: multiple of 8, as large as block_batch allows; prefer >= 2
    # tiles when B permits so both v7x TensorCores get work on the "parallel"
    # batch axis.
    tb = min(block_batch, _round_up(B, 8))
    if _round_up(B, tb) // tb < 2 and B >= 16:
        tb = _round_up(max(8, _round_up(B, 8) // 2), 8)
    Bp = _round_up(B, tb)

    xp = _pad_to(x, (Bp, Dp)).astype(compute_dtype)

    grid = (Bp // tb,)
    itemsize = jnp.dtype(compute_dtype).itemsize

    # Honest cost estimate: resident weights are read exactly once.
    flops = 2 * Bp * (Dp * Hp + Hp * NHp + NHp * Op)
    transcendentals = Bp * (Hp + NHp)
    bytes_accessed = (xp.size * itemsize
                      + (w_in_p.size + w_stack_p.size + w_out_p.size) * itemsize
                      + (b_in_p.size + b_stack_p.size + b_out_p.size) * 4
                      + Bp * Op * 4)

    # VMEM budget: double-buffered x/out tiles + resident weights + the h/Z
    # intermediates Mosaic will materialize. Capped under v7x's 64 MiB physical.
    vmem_bytes = (2 * tb * Dp * itemsize
                  + 2 * tb * Op * 4
                  + (Hp * Dp + NHp * Hp + Op * NHp) * itemsize
                  + (Hp + NHp + Op) * 4
                  + 2 * tb * (Hp + NHp) * 4)
    vmem_limit = int(min(64 * 1024 * 1024,
                         max(16 * 1024 * 1024, 2 * vmem_bytes)))

    out = pl.pallas_call(
        kan_fused_kernel,
        out_shape=jax.ShapeDtypeStruct((Bp, Op), jnp.float32),
        grid_spec=pltpu.PrefetchScalarGridSpec(
            num_scalar_prefetch=0,
            grid=grid,
            in_specs=[
                # x: one batch tile per grid step.
                pl.BlockSpec((tb, Dp), lambda b: (b, 0)),
                # Weights/biases: constant block index -> VMEM-resident,
                # DMA'd once for the whole call.
                pl.BlockSpec((Hp, Dp), lambda b: (0, 0)),
                pl.BlockSpec((1, Hp), lambda b: (0, 0)),
                pl.BlockSpec((NHp, Hp), lambda b: (0, 0)),
                pl.BlockSpec((1, NHp), lambda b: (0, 0)),
                pl.BlockSpec((Op, NHp), lambda b: (0, 0)),
                pl.BlockSpec((1, Op), lambda b: (0, 0)),
            ],
            out_specs=pl.BlockSpec((tb, Op), lambda b: (b, 0)),
        ),
        compiler_params=pltpu.CompilerParams(
            dimension_semantics=("parallel",),
            vmem_limit_bytes=vmem_limit,
        ),
        cost_estimate=pl.CostEstimate(
            flops=flops,
            transcendentals=transcendentals,
            bytes_accessed=bytes_accessed,
        ),
    )(xp, w_in_p, b_in_p, w_stack_p, b_stack_p, w_out_p, b_out_p)

    return out[:B, :O]


def kan_forward(x, w_in, b_in, w_inner, b_inner, w_out, b_out,
                *, block_batch=256, compute_dtype=jnp.float32):
    """Convenience wrapper (preps params every call; prefer preparing once).

    compute_dtype=jnp.bfloat16 is recommended on v6e/v7x (f32 accumulation and
    f32 epilogue are kept regardless).
    """
    params, meta = kan_prepare_params(
        w_in, b_in, w_inner, b_inner, w_out, b_out,
        compute_dtype=compute_dtype)
    return kan_forward_prepared(x, params, meta, block_batch=block_batch)


def kan_reference(x, w_in, b_in, w_inner, b_inner, w_out, b_out):
    """Pure-JAX reference matching the PyTorch KAN.forward."""
    h = jnp.tanh(x @ w_in.T + b_in)
    zs = [jnp.tanh(h @ w_inner[i].T + b_inner[i])
          for i in range(w_inner.shape[0])]
    z = jnp.concatenate(zs, axis=1)
    return z @ w_out.T + b_out


if __name__ == "__main__":
    # Small shapes consistent with the module.
    batch, input_dim, hidden_dim, output_dim, num_inner = 8, 32, 64, 16, 3

    key = jax.random.PRNGKey(0)
    ks = jax.random.split(key, 6)

    def linear_init(kw, kb, out_d, in_d):
        bound = 1.0 / (in_d ** 0.5)
        w = jax.random.uniform(kw, (out_d, in_d), minval=-bound, maxval=bound,
                               dtype=jnp.float32)
        b = jax.random.uniform(kb, (out_d,), minval=-bound, maxval=bound,
                               dtype=jnp.float32)
        return w, b

    x = jax.random.normal(ks[0], (batch, input_dim), dtype=jnp.float32)
    w_in, b_in = linear_init(ks[1], ks[2], hidden_dim, input_dim)

    kin = jax.random.split(ks[3], 2 * num_inner)
    ws, bs = [], []
    for i in range(num_inner):
        w, b = linear_init(kin[2 * i], kin[2 * i + 1], hidden_dim, hidden_dim)
        ws.append(w)
        bs.append(b)
    w_inner = jnp.stack(ws)
    b_inner = jnp.stack(bs)

    w_out, b_out = linear_init(ks[4], ks[5], output_dim,
                               hidden_dim * num_inner)

    ref = kan_reference(x, w_in, b_in, w_inner, b_inner, w_out, b_out)

    # f32 operands (strict check); params prepared once, reused across calls.
    params_f32, meta_f32 = kan_prepare_params(
        w_in, b_in, w_inner, b_inner, w_out, b_out,
        compute_dtype=jnp.float32)
    out_f32 = jax.block_until_ready(
        kan_forward_prepared(x, params_f32, meta_f32))
    assert out_f32.shape == (batch, output_dim)
    assert jnp.allclose(out_f32, ref, atol=1e-5, rtol=1e-5), "f32 mismatch"

    # bf16 operands, f32 accumulation (v6e/v7x MXU path); looser tolerance.
    params_bf16, meta_bf16 = kan_prepare_params(
        w_in, b_in, w_inner, b_inner, w_out, b_out,
        compute_dtype=jnp.bfloat16)
    out_bf16 = jax.block_until_ready(
        kan_forward_prepared(x, params_bf16, meta_bf16))
    assert out_bf16.shape == (batch, output_dim)
    assert jnp.allclose(out_bf16, ref, atol=5e-2, rtol=5e-2), "bf16 mismatch"

    print("KERNEL_OK")
</pallas_src>

<mosaic_0001>
module attributes {stable_mosaic.version = 11 : i64} {
  func.func @kan_fused_kernel(%arg0: i32, %arg1: memref<8x128xf32, #tpu.memory_space<vmem>>, %arg2: memref<128x128xf32, #tpu.memory_space<vmem>>, %arg3: memref<1x128xf32, #tpu.memory_space<vmem>>, %arg4: memref<384x128xf32, #tpu.memory_space<vmem>>, %arg5: memref<1x384xf32, #tpu.memory_space<vmem>>, %arg6: memref<128x384xf32, #tpu.memory_space<vmem>>, %arg7: memref<1x128xf32, #tpu.memory_space<vmem>>, %arg8: memref<8x128xf32, #tpu.memory_space<vmem>>) attributes {dimension_semantics = [#tpu.dimension_semantics<parallel>], iteration_bounds = array<i64: 1>, scalar_prefetch = 0 : i64, scratch_operands = 0 : i64, tpu.core_type = #tpu.core_type<tc>, window_params = [{transform_indices = @transform_0, window_bounds = array<i64: 8, 128>}, {pipeline_mode = #tpu.pipeline_mode<synchronous>, transform_indices = @transform_1, window_bounds = array<i64: 128, 128>}, {pipeline_mode = #tpu.pipeline_mode<synchronous>, transform_indices = @transform_2, window_bounds = array<i64: 1, 128>}, {pipeline_mode = #tpu.pipeline_mode<synchronous>, transform_indices = @transform_3, window_bounds = array<i64: 384, 128>}, {pipeline_mode = #tpu.pipeline_mode<synchronous>, transform_indices = @transform_4, window_bounds = array<i64: 1, 384>}, {pipeline_mode = #tpu.pipeline_mode<synchronous>, transform_indices = @transform_5, window_bounds = array<i64: 128, 384>}, {pipeline_mode = #tpu.pipeline_mode<synchronous>, transform_indices = @transform_6, window_bounds = array<i64: 1, 128>}, {transform_indices = @transform_7, window_bounds = array<i64: 8, 128>}]} {
    %c0 = arith.constant 0 : index
    %c0_0 = arith.constant 0 : index
    %0 = vector.load %arg1[%c0, %c0_0] : memref<8x128xf32, #tpu.memory_space<vmem>>, vector<8x128xf32>
    %c0_1 = arith.constant 0 : index
    %c0_2 = arith.constant 0 : index
    %1 = vector.load %arg2[%c0_1, %c0_2] : memref<128x128xf32, #tpu.memory_space<vmem>>, vector<128x128xf32>
    %cst = arith.constant dense<0.000000e+00> : vector<8x128xf32>
    %2 = tpu.matmul %0, %1, %cst {dimension_numbers = #tpu.dot_dimension_numbers<[1], [1], [0], [0], [0, 0, 1, 0], [], []>} : vector<8x128xf32>, vector<128x128xf32>, vector<8x128xf32> -> vector<8x128xf32>
    %c0_3 = arith.constant 0 : index
    %c0_4 = arith.constant 0 : index
    %3 = vector.load %arg3[%c0_3, %c0_4] : memref<1x128xf32, #tpu.memory_space<vmem>>, vector<1x128xf32>
    %4 = vector.broadcast %3 : vector<1x128xf32> to vector<8x128xf32>
    %5 = arith.addf %2, %4 : vector<8x128xf32>
    %6 = math.tanh %5 : vector<8x128xf32>
    %c0_5 = arith.constant 0 : index
    %c0_6 = arith.constant 0 : index
    %7 = vector.load %arg4[%c0_5, %c0_6] : memref<384x128xf32, #tpu.memory_space<vmem>>, vector<384x128xf32>
    %cst_7 = arith.constant dense<0.000000e+00> : vector<8x384xf32>
    %8 = tpu.matmul %6, %7, %cst_7 {dimension_numbers = #tpu.dot_dimension_numbers<[1], [1], [0], [0], [0, 0, 1, 0], [], []>} : vector<8x128xf32>, vector<384x128xf32>, vector<8x384xf32> -> vector<8x384xf32>
    %c0_8 = arith.constant 0 : index
    %c0_9 = arith.constant 0 : index
    %9 = vector.load %arg5[%c0_8, %c0_9] : memref<1x384xf32, #tpu.memory_space<vmem>>, vector<1x384xf32>
    %10 = vector.broadcast %9 : vector<1x384xf32> to vector<8x384xf32>
    %11 = arith.addf %8, %10 : vector<8x384xf32>
    %12 = math.tanh %11 : vector<8x384xf32>
    %c0_10 = arith.constant 0 : index
    %c0_11 = arith.constant 0 : index
    %13 = vector.load %arg6[%c0_10, %c0_11] : memref<128x384xf32, #tpu.memory_space<vmem>>, vector<128x384xf32>
    %cst_12 = arith.constant dense<0.000000e+00> : vector<8x128xf32>
    %14 = tpu.matmul %12, %13, %cst_12 {dimension_numbers = #tpu.dot_dimension_numbers<[1], [1], [0], [0], [0, 0, 1, 0], [], []>} : vector<8x384xf32>, vector<128x384xf32>, vector<8x128xf32> -> vector<8x128xf32>
    %c0_13 = arith.constant 0 : index
    %c0_14 = arith.constant 0 : index
    %15 = vector.load %arg7[%c0_13, %c0_14] : memref<1x128xf32, #tpu.memory_space<vmem>>, vector<1x128xf32>
    %16 = vector.broadcast %15 : vector<1x128xf32> to vector<8x128xf32>
    %17 = arith.addf %14, %16 : vector<8x128xf32>
    %c0_15 = arith.constant 0 : index
    %c0_16 = arith.constant 0 : index
    %18 = vector.load %arg8[%c0_15, %c0_16] : memref<8x128xf32, #tpu.memory_space<vmem>>, vector<8x128xf32>
    tpu.vector_store %arg8[%c0_15, %c0_16], %17 {strides = array<i32>} : memref<8x128xf32, #tpu.memory_space<vmem>>, vector<8x128xf32>,
    return
  }
  func.func @transform_0(%arg0: i32) -> (i32, i32) {
    %c0_i32 = arith.constant 0 : i32
    %c0_i32_0 = arith.constant 0 : i32
    return %arg0, %c0_i32 : i32, i32
  }
  func.func @transform_1(%arg0: i32) -> (i32, i32) {
    %c0_i32 = arith.constant 0 : i32
    %c0_i32_0 = arith.constant 0 : i32
    %c0_i32_1 = arith.constant 0 : i32
    return %c0_i32, %c0_i32_0 : i32, i32
  }
  func.func @transform_2(%arg0: i32) -> (i32, i32) {
    %c0_i32 = arith.constant 0 : i32
    %c0_i32_0 = arith.constant 0 : i32
    %c0_i32_1 = arith.constant 0 : i32
    return %c0_i32, %c0_i32_0 : i32, i32
  }
  func.func @transform_3(%arg0: i32) -> (i32, i32) {
    %c0_i32 = arith.constant 0 : i32
    %c0_i32_0 = arith.constant 0 : i32
    %c0_i32_1 = arith.constant 0 : i32
    return %c0_i32, %c0_i32_0 : i32, i32
  }
  func.func @transform_4(%arg0: i32) -> (i32, i32) {
    %c0_i32 = arith.constant 0 : i32
    %c0_i32_0 = arith.constant 0 : i32
    %c0_i32_1 = arith.constant 0 : i32
    return %c0_i32, %c0_i32_0 : i32, i32
  }
  func.func @transform_5(%arg0: i32) -> (i32, i32) {
    %c0_i32 = arith.constant 0 : i32
    %c0_i32_0 = arith.constant 0 : i32
    %c0_i32_1 = arith.constant 0 : i32
    return %c0_i32, %c0_i32_0 : i32, i32
  }
  func.func @transform_6(%arg0: i32) -> (i32, i32) {
    %c0_i32 = arith.constant 0 : i32
    %c0_i32_0 = arith.constant 0 : i32
    %c0_i32_1 = arith.constant 0 : i32
    return %c0_i32, %c0_i32_0 : i32, i32
  }
  func.func @transform_7(%arg0: i32) -> (i32, i32) {
    %c0_i32 = arith.constant 0 : i32
    %c0_i32_0 = arith.constant 0 : i32
    return %arg0, %c0_i32 : i32, i32
  }
}

</mosaic_0001>

<llo_original>
// kernel: tpu_custom_call.1
$region0: #{tpu_custom_call.1}
  #allocation0 [shape = 'u32[]', space=smem, size = 0x4, offset = 0x4, fixed_abs, tag = 'smem constant byte address 0x4 - core index']
  #allocation1 [shape = 'u32[72,128]{1,0:T(1,128)}', space=vmem, size = 0x9000, scoped, tag = 'internal scratch']
  %s0 = inlined_call_operand.hbm [shape: f32[8,128], index: 0, kind: input, shape index: {}]
  %s1 = inlined_call_operand.hbm [shape: f32[128,128], index: 1, kind: input, shape index: {}]
  %s2 = inlined_call_operand.hbm [shape: f32[1,128], index: 2, kind: input, shape index: {}]
  %s3 = inlined_call_operand.hbm [shape: f32[384,128], index: 3, kind: input, shape index: {}]
  %s4 = inlined_call_operand.vmem [shape: f32[1,384], index: 4, kind: input, shape index: {}]
  %s5 = inlined_call_operand.hbm [shape: f32[128,384], index: 5, kind: input, shape index: {}]
  %s6 = inlined_call_operand.vmem [shape: f32[1,128], index: 6, kind: input, shape index: {}]
  %s7 = inlined_call_operand.hbm [shape: f32[8,128], index: 7, kind: output, shape index: {}]
  %s8 = sld [smem:[#allocation0]]
  $region58: #{tpu_custom_call.1} parent=0
    _
  %s10 = ssub.s32 1, %s8
  %s11 = scalar_select 0, %s10, %s8
  $region1: #{tpu_custom_call.1} parent=0
    #allocation2 [shape = 'u8[4096]{0}', space=vmem, size = 0x1000, scoped, tag = 'input window, operand 0, single buffered']
    #allocation3 [shape = 's32[1]{0}', space=sflag, size = 0x4, scoped, tag = 'scoped memory for tpu_custom_call.1']
    #allocation4 [shape = 's32[1]{0}', space=sflag, size = 0x4, scoped, tag = 'scoped memory for tpu_custom_call.1']
    #allocation5 [shape = 'u8[65536]{0}', space=vmem, size = 0x10000, scoped, tag = 'input window, operand 1, single buffered']
    #allocation6 [shape = 's32[1]{0}', space=sflag, size = 0x4, scoped, tag = 'scoped memory for tpu_custom_call.1']
    #allocation7 [shape = 'u8[512]{0}', space=vmem, size = 0x400, scoped, tag = 'input window, operand 2, single buffered']
    #allocation8 [shape = 'u8[196608]{0}', space=vmem, size = 0x30000, scoped, tag = 'input window, operand 3, single buffered']
    #allocation9 [shape = 's32[1]{0}', space=sflag, size = 0x4, scoped, tag = 'scoped memory for tpu_custom_call.1']
    #allocation10 [shape = 'u8[196608]{0}', space=vmem, size = 0x30000, scoped, tag = 'input window, operand 5, single buffered']
    #allocation11 [shape = 'u8[4096]{0}', space=vmem, size = 0x1000, scoped, tag = 'output window, operand 0, single buffered']
    %12 = vsyncpa [#allocation3], 0
    %13 = vsyncpa [#allocation6], 0
    %14 = vsyncpa [#allocation9], 0
    %15 = vsyncpa [#allocation4], 0
    // Predicated region
    $region2: #{tpu_custom_call.1} parent=1 // pred_check
      _
    $region3: #{tpu_custom_call.1} parent=1 // pred_check_branch
      %17 = sbr.rel (0) target = $region5
    $region4: #{tpu_custom_call.1} parent=1 // pred_region
      %19 = vsyncadd [#allocation3], 0
      %s21 = sshll.u32 %s0, 4
      %s22 = int_to_ptr.hbm [resolvable:$true] %s21
      %s23 = sshll.u32 [#allocation2], 4
      %s24 = int_to_ptr.vmem [resolvable:$true] %s23
      %26 = dma.hbm_to_vmem [thread:$0]  %s22, 128, %s24, [#allocation3]
    $region5: #{tpu_custom_call.1} parent=1 // pred_fallthru
      _
    // Predicated region
    $region6: #{tpu_custom_call.1} parent=1 // pred_check
      _
    $region7: #{tpu_custom_call.1} parent=1 // pred_check_branch
      %28 = sbr.rel (0) target = $region9
    $region8: #{tpu_custom_call.1} parent=1 // pred_region
      %30 = vsyncadd [#allocation6], 0
      %s31 = sshll.u32 %s1, 4
      %s32 = int_to_ptr.hbm [resolvable:$true] %s31
      %s33 = sshll.u32 [#allocation5], 4
      %s34 = int_to_ptr.vmem [resolvable:$true] %s33
      %39 = dma.hbm_to_vmem [thread:$0]  %s32, 2048, %s34, [#allocation6], 128, 128, 8
    $region9: #{tpu_custom_call.1} parent=1 // pred_fallthru
      _
    // Predicated region
    $region10: #{tpu_custom_call.1} parent=1 // pred_check
      _
    $region11: #{tpu_custom_call.1} parent=1 // pred_check_branch
      %41 = sbr.rel (0) target = $region13
    $region12: #{tpu_custom_call.1} parent=1 // pred_region
      %43 = vsyncadd [#allocation6], 0
      %s45 = sshll.u32 %s2, 4
      %s46 = int_to_ptr.hbm [resolvable:$true] %s45
      %s47 = sshll.u32 [#allocation7], 4
      %s48 = int_to_ptr.vmem [resolvable:$true] %s47
      %50 = dma.hbm_to_vmem [thread:$0]  %s46, 16, %s48, [#allocation6]
    $region13: #{tpu_custom_call.1} parent=1 // pred_fallthru
      _
    // Predicated region
    $region14: #{tpu_custom_call.1} parent=1 // pred_check
      _
    $region15: #{tpu_custom_call.1} parent=1 // pred_check_branch
      %52 = sbr.rel (0) target = $region17
    $region16: #{tpu_custom_call.1} parent=1 // pred_region
      %54 = vsyncadd [#allocation9], 0
      %s55 = sshll.u32 %s3, 4
      %s56 = int_to_ptr.hbm [resolvable:$true] %s55
      %s57 = sshll.u32 [#allocation8], 4
      %s58 = int_to_ptr.vmem [resolvable:$true] %s57
      %63 = dma.hbm_to_vmem [thread:$0]  %s56, 6144, %s58, [#allocation9], 128, 128, 8
    $region17: #{tpu_custom_call.1} parent=1 // pred_fallthru
      _
    // Predicated region
    $region18: #{tpu_custom_call.1} parent=1 // pred_check
      _
    $region19: #{tpu_custom_call.1} parent=1 // pred_check_branch
      %65 = sbr.rel (0) target = $region21
    $region20: #{tpu_custom_call.1} parent=1 // pred_region
      _
    $region21: #{tpu_custom_call.1} parent=1 // pred_fallthru
      _
    // Predicated region
    $region22: #{tpu_custom_call.1} parent=1 // pred_check
      _
    $region23: #{tpu_custom_call.1} parent=1 // pred_check_branch
      %67 = sbr.rel (0) target = $region25
    $region24: #{tpu_custom_call.1} parent=1 // pred_region
      %69 = vsyncadd [#allocation9], 0
      %s70 = sshll.u32 %s5, 4
      %s71 = int_to_ptr.hbm [resolvable:$true] %s70
      %s72 = sshll.u32 [#allocation10], 4
      %s73 = int_to_ptr.vmem [resolvable:$true] %s72
      %78 = dma.hbm_to_vmem [thread:$0]  %s71, 6144, %s73, [#allocation9], 384, 384, 24
    $region25: #{tpu_custom_call.1} parent=1 // pred_fallthru
      _
    // Predicated region
    $region26: #{tpu_custom_call.1} parent=1 // pred_check
      _
    $region27: #{tpu_custom_call.1} parent=1 // pred_check_branch
      %80 = sbr.rel (0) target = $region29
    $region28: #{tpu_custom_call.1} parent=1 // pred_region
      _
    $region29: #{tpu_custom_call.1} parent=1 // pred_fallthru
      _
    // Predicated region
    $region30: #{tpu_custom_call.1} parent=1 // pred_check
      _
    $region31: #{tpu_custom_call.1} parent=1 // pred_check_branch
      %82 = sbr.rel (0) target = $region33
    $region32: #{tpu_custom_call.1} parent=1 // pred_region
      %84 = dma.done [#allocation3], 128
    $region33: #{tpu_custom_call.1} parent=1 // pred_fallthru
      _
    // Predicated region
    $region34: #{tpu_custom_call.1} parent=1 // pred_check
      _
    $region35: #{tpu_custom_call.1} parent=1 // pred_check_branch
      %86 = sbr.rel (0) target = $region37
    $region36: #{tpu_custom_call.1} parent=1 // pred_region
      %88 = dma.done [#allocation6], 2048
    $region37: #{tpu_custom_call.1} parent=1 // pred_fallthru
      _
    // Predicated region
    $region38: #{tpu_custom_call.1} parent=1 // pred_check
      _
    $region39: #{tpu_custom_call.1} parent=1 // pred_check_branch
      %90 = sbr.rel (0) target = $region41
    $region40: #{tpu_custom_call.1} parent=1 // pred_region
      %92 = dma.done [#allocation6], 16
    $region41: #{tpu_custom_call.1} parent=1 // pred_fallthru
      _
    // Predicated region
    $region42: #{tpu_custom_call.1} parent=1 // pred_check
      _
    $region43: #{tpu_custom_call.1} parent=1 // pred_check_branch
      %94 = sbr.rel (0) target = $region45
    $region44: #{tpu_custom_call.1} parent=1 // pred_region
      %96 = dma.done [#allocation9], 6144
    $region45: #{tpu_custom_call.1} parent=1 // pred_fallthru
      _
    // Predicated region
    $region46: #{tpu_custom_call.1} parent=1 // pred_check
      _
    $region47: #{tpu_custom_call.1} parent=1 // pred_check_branch
      %98 = sbr.rel (0) target = $region49
    $region48: #{tpu_custom_call.1} parent=1 // pred_region
      %100 = dma.done [#allocation9], 6144
    $region49: #{tpu_custom_call.1} parent=1 // pred_fallthru
      _
    %v101 = vld [vmem:[#allocation2] sm:$0xff]
    %v102 = vld [vmem:[#allocation5] sm:$0xff]
    %v103 = vld [vmem:[#allocation5 + $0x8] sm:$0xff]
    %v104 = vld [vmem:[#allocation5 + $0x10] sm:$0xff]
    %v105 = vld [vmem:[#allocation5 + $0x18] sm:$0xff]
    %v106 = vld [vmem:[#allocation5 + $0x20] sm:$0xff]
    %v107 = vld [vmem:[#allocation5 + $0x28] sm:$0xff]
    %v108 = vld [vmem:[#allocation5 + $0x30] sm:$0xff]
    %v109 = vld [vmem:[#allocation5 + $0x38] sm:$0xff]
    %v110 = vld [vmem:[#allocation5 + $0x40] sm:$0xff]
    %v111 = vld [vmem:[#allocation5 + $0x48] sm:$0xff]
    %v112 = vld [vmem:[#allocation5 + $0x50] sm:$0xff]
    %v113 = vld [vmem:[#allocation5 + $0x58] sm:$0xff]
    %v114 = vld [vmem:[#allocation5 + $0x60] sm:$0xff]
    %v115 = vld [vmem:[#allocation5 + $0x68] sm:$0xff]
    %v116 = vld [vmem:[#allocation5 + $0x70] sm:$0xff]
    %v117 = vld [vmem:[#allocation5 + $0x78] sm:$0xff]
    %v118 = vld [vmem:[#allocation7] sm:$0x1]
    %v120 = vperm.slane %v118, 0
    %122 = vmatpush.xpose.msra.mxu0 %v117
    %123 = vmatpush.xpose.msra.mxu0 %v116
    %124 = vmatpush.xpose.msra.mxu0 %v115
    %125 = vmatpush.xpose.msra.mxu0 %v114
    %126 = vmatpush.xpose.msra.mxu0 %v113
    %127 = vmatpush.xpose.msra.mxu0 %v112
    %128 = vmatpush.xpose.msra.mxu0 %v111
    %129 = vmatpush.xpose.msra.mxu0 %v110
    %130 = vmatpush.xpose.msra.mxu0 %v109
    %131 = vmatpush.xpose.msra.mxu0 %v108
    %132 = vmatpush.xpose.msra.mxu0 %v107
    %133 = vmatpush.xpose.msra.mxu0 %v106
    %134 = vmatpush.xpose.msra.mxu0 %v105
    %135 = vmatpush.xpose.msra.mxu0 %v104
    %136 = vmatpush.xpose.msra.mxu0 %v103
    %137 = vmatpush.xpose.msra.mxu0 %v102
    %138 = vmatmul.f32.gmra.mxu0 %v101
    %v139 = vpop.f32.mrf.mxu0
    %v140 = vadd.f32 %v120, %v139
    %141 = vdwg.mxu0
    %v142 = vtanh.pop %v140
    %v143 = vld [vmem:[#allocation8] sm:$0xff]
    %v144 = vld [vmem:[#allocation8 + $0x8] sm:$0xff]
    %v145 = vld [vmem:[#allocation8 + $0x10] sm:$0xff]
    %v146 = vld [vmem:[#allocation8 + $0x18] sm:$0xff]
    %v147 = vld [vmem:[#allocation8 + $0x20] sm:$0xff]
    %v148 = vld [vmem:[#allocation8 + $0x28] sm:$0xff]
    %v149 = vld [vmem:[#allocation8 + $0x30] sm:$0xff]
    %v150 = vld [vmem:[#allocation8 + $0x38] sm:$0xff]
    %v151 = vld [vmem:[#allocation8 + $0x40] sm:$0xff]
    %v152 = vld [vmem:[#allocation8 + $0x48] sm:$0xff]
    %v153 = vld [vmem:[#allocation8 + $0x50] sm:$0xff]
    %v154 = vld [vmem:[#allocation8 + $0x58] sm:$0xff]
    %v155 = vld [vmem:[#allocation8 + $0x60] sm:$0xff]
    %v156 = vld [vmem:[#allocation8 + $0x68] sm:$0xff]
    %v157 = vld [vmem:[#allocation8 + $0x70] sm:$0xff]
    %v158 = vld [vmem:[#allocation8 + $0x78] sm:$0xff]
    %v159 = vld [vmem:[#allocation8 + $0x80] sm:$0xff]
    %v160 = vld [vmem:[#allocation8 + $0x88] sm:$0xff]
    %v161 = vld [vmem:[#allocation8 + $0x90] sm:$0xff]
    %v162 = vld [vmem:[#allocation8 + $0x98] sm:$0xff]
    %v163 = vld [vmem:[#allocation8 + $0xa0] sm:$0xff]
    %v164 = vld [vmem:[#allocation8 + $0xa8] sm:$0xff]
    %v165 = vld [vmem:[#allocation8 + $0xb0] sm:$0xff]
    %v166 = vld [vmem:[#allocation8 + $0xb8] sm:$0xff]
    %v167 = vld [vmem:[#allocation8 + $0xc0] sm:$0xff]
    %v168 = vld [vmem:[#allocation8 + $0xc8] sm:$0xff]
    %v169 = vld [vmem:[#allocation8 + $0xd0] sm:$0xff]
    %v170 = vld [vmem:[#allocation8 + $0xd8] sm:$0xff]
    %v171 = vld [vmem:[#allocation8 + $0xe0] sm:$0xff]
    %v172 = vld [vmem:[#allocation8 + $0xe8] sm:$0xff]
    %v173 = vld [vmem:[#allocation8 + $0xf0] sm:$0xff]
    %v174 = vld [vmem:[#allocation8 + $0xf8] sm:$0xff]
    %v175 = vld [vmem:[#allocation8 + $0x100] sm:$0xff]
    %v176 = vld [vmem:[#allocation8 + $0x108] sm:$0xff]
    %v177 = vld [vmem:[#allocation8 + $0x110] sm:$0xff]
    %v178 = vld [vmem:[#allocation8 + $0x118] sm:$0xff]
    %v179 = vld [vmem:[#allocation8 + $0x120] sm:$0xff]
    %v180 = vld [vmem:[#allocation8 + $0x128] sm:$0xff]
    %v181 = vld [vmem:[#allocation8 + $0x130] sm:$0xff]
    %v182 = vld [vmem:[#allocation8 + $0x138] sm:$0xff]
    %v183 = vld [vmem:[#allocation8 + $0x140] sm:$0xff]
    %v184 = vld [vmem:[#allocation8 + $0x148] sm:$0xff]
    %v185 = vld [vmem:[#allocation8 + $0x150] sm:$0xff]
    %v186 = vld [vmem:[#allocation8 + $0x158] sm:$0xff]
    %v187 = vld [vmem:[#allocation8 + $0x160] sm:$0xff]
    %v188 = vld [vmem:[#allocation8 + $0x168] sm:$0xff]
    %v189 = vld [vmem:[#allocation8 + $0x170] sm:$0xff]
    %v190 = vld [vmem:[#allocation8 + $0x178] sm:$0xff]
    %v191 = vld [vmem:[%s4] sm:$0x7]
    %v193 = vperm.slane %v191, 0
    %v194 = vperm.slane %v191, 1
    %v195 = vperm.slane %v191, 2
    %199 = vmatpush.xpose.msra.mxu0 %v158
    %200 = vmatpush.xpose.msra.mxu0 %v157
    %201 = vmatpush.xpose.msra.mxu0 %v156
    %202 = vmatpush.xpose.msra.mxu0 %v155
    %203 = vmatpush.xpose.msra.mxu0 %v154
    %204 = vmatpush.xpose.msra.mxu0 %v153
    %205 = vmatpush.xpose.msra.mxu0 %v152
    %206 = vmatpush.xpose.msra.mxu0 %v151
    %207 = vmatpush.xpose.msra.mxu0 %v150
    %208 = vmatpush.xpose.msra.mxu0 %v149
    %209 = vmatpush.xpose.msra.mxu0 %v148
    %210 = vmatpush.xpose.msra.mxu0 %v147
    %211 = vmatpush.xpose.msra.mxu0 %v146
    %212 = vmatpush.xpose.msra.mxu0 %v145
    %213 = vmatpush.xpose.msra.mxu0 %v144
    %214 = vmatpush.xpose.msra.mxu0 %v143
    %215 = vmatmul.f32.gmra.mxu0 %v142
    %v216 = vpop.f32.mrf.mxu0
    %v217 = vadd.f32 %v193, %v216
    %218 = vdwg.mxu0
    %219 = vmatpush.xpose.msra.mxu0 %v174
    %220 = vmatpush.xpose.msra.mxu0 %v173
    %221 = vmatpush.xpose.msra.mxu0 %v172
    %222 = vmatpush.xpose.msra.mxu0 %v171
    %223 = vmatpush.xpose.msra.mxu0 %v170
    %224 = vmatpush.xpose.msra.mxu0 %v169
    %225 = vmatpush.xpose.msra.mxu0 %v168
    %226 = vmatpush.xpose.msra.mxu0 %v167
    %227 = vmatpush.xpose.msra.mxu0 %v166
    %228 = vmatpush.xpose.msra.mxu0 %v165
    %229 = vmatpush.xpose.msra.mxu0 %v164
    %230 = vmatpush.xpose.msra.mxu0 %v163
    %231 = vmatpush.xpose.msra.mxu0 %v162
    %232 = vmatpush.xpose.msra.mxu0 %v161
    %233 = vmatpush.xpose.msra.mxu0 %v160
    %234 = vmatpush.xpose.msra.mxu0 %v159
    %235 = vmatmul.f32.gmra.mxu0 %v142
    %v236 = vpop.f32.mrf.mxu0
    %v237 = vadd.f32 %v194, %v236
    %238 = vdwg.mxu0
    %239 = vmatpush.xpose.msra.mxu0 %v190
    %240 = vmatpush.xpose.msra.mxu0 %v189
    %241 = vmatpush.xpose.msra.mxu0 %v188
    %242 = vmatpush.xpose.msra.mxu0 %v187
    %243 = vmatpush.xpose.msra.mxu0 %v186
    %244 = vmatpush.xpose.msra.mxu0 %v185
    %245 = vmatpush.xpose.msra.mxu0 %v184
    %246 = vmatpush.xpose.msra.mxu0 %v183
    %247 = vmatpush.xpose.msra.mxu0 %v182
    %248 = vmatpush.xpose.msra.mxu0 %v181
    %249 = vmatpush.xpose.msra.mxu0 %v180
    %250 = vmatpush.xpose.msra.mxu0 %v179
    %251 = vmatpush.xpose.msra.mxu0 %v178
    %252 = vmatpush.xpose.msra.mxu0 %v177
    %253 = vmatpush.xpose.msra.mxu0 %v176
    %254 = vmatpush.xpose.msra.mxu0 %v175
    %255 = vmatmul.f32.gmra.mxu0 %v142
    %v256 = vpop.f32.mrf.mxu0
    %v257 = vadd.f32 %v195, %v256
    %258 = vdwg.mxu0
    %v259 = vtanh.pop %v217
    %v260 = vtanh.pop %v237
    %v261 = vtanh.pop %v257
    %v262 = vld [vmem:[#allocation10] sm:$0xff]
    %v263 = vld [vmem:[#allocation10 + $0x8] sm:$0xff]
    %v264 = vld [vmem:[#allocation10 + $0x10] sm:$0xff]
    %v265 = vld [vmem:[#allocation10 + $0x18] sm:$0xff]
    %v266 = vld [vmem:[#allocation10 + $0x20] sm:$0xff]
    %v267 = vld [vmem:[#allocation10 + $0x28] sm:$0xff]
    %v268 = vld [vmem:[#allocation10 + $0x30] sm:$0xff]
    %v269 = vld [vmem:[#allocation10 + $0x38] sm:$0xff]
    %v270 = vld [vmem:[#allocation10 + $0x40] sm:$0xff]
    %v271 = vld [vmem:[#allocation10 + $0x48] sm:$0xff]
    %v272 = vld [vmem:[#allocation10 + $0x50] sm:$0xff]
    %v273 = vld [vmem:[#allocation10 + $0x58] sm:$0xff]
    %v274 = vld [vmem:[#allocation10 + $0x60] sm:$0xff]
    %v275 = vld [vmem:[#allocation10 + $0x68] sm:$0xff]
    %v276 = vld [vmem:[#allocation10 + $0x70] sm:$0xff]
    %v277 = vld [vmem:[#allocation10 + $0x78] sm:$0xff]
    %v278 = vld [vmem:[#allocation10 + $0x80] sm:$0xff]
    %v279 = vld [vmem:[#allocation10 + $0x88] sm:$0xff]
    %v280 = vld [vmem:[#allocation10 + $0x90] sm:$0xff]
    %v281 = vld [vmem:[#allocation10 + $0x98] sm:$0xff]
    %v282 = vld [vmem:[#allocation10 + $0xa0] sm:$0xff]
    %v283 = vld [vmem:[#allocation10 + $0xa8] sm:$0xff]
    %v284 = vld [vmem:[#allocation10 + $0xb0] sm:$0xff]
    %v285 = vld [vmem:[#allocation10 + $0xb8] sm:$0xff]
    %v286 = vld [vmem:[#allocation10 + $0xc0] sm:$0xff]
    %v287 = vld [vmem:[#allocation10 + $0xc8] sm:$0xff]
    %v288 = vld [vmem:[#allocation10 + $0xd0] sm:$0xff]
    %v289 = vld [vmem:[#allocation10 + $0xd8] sm:$0xff]
    %v290 = vld [vmem:[#allocation10 + $0xe0] sm:$0xff]
    %v291 = vld [vmem:[#allocation10 + $0xe8] sm:$0xff]
    %v292 = vld [vmem:[#allocation10 + $0xf0] sm:$0xff]
    %v293 = vld [vmem:[#allocation10 + $0xf8] sm:$0xff]
    %v294 = vld [vmem:[#allocation10 + $0x100] sm:$0xff]
    %v295 = vld [vmem:[#allocation10 + $0x108] sm:$0xff]
    %v296 = vld [vmem:[#allocation10 + $0x110] sm:$0xff]
    %v297 = vld [vmem:[#allocation10 + $0x118] sm:$0xff]
    %v298 = vld [vmem:[#allocation10 + $0x120] sm:$0xff]
    %v299 = vld [vmem:[#allocation10 + $0x128] sm:$0xff]
    %v300 = vld [vmem:[#allocation10 + $0x130] sm:$0xff]
    %v301 = vld [vmem:[#allocation10 + $0x138] sm:$0xff]
    %v302 = vld [vmem:[#allocation10 + $0x140] sm:$0xff]
    %v303 = vld [vmem:[#allocation10 + $0x148] sm:$0xff]
    %v304 = vld [vmem:[#allocation10 + $0x150] sm:$0xff]
    %v305 = vld [vmem:[#allocation10 + $0x158] sm:$0xff]
    %v306 = vld [vmem:[#allocation10 + $0x160] sm:$0xff]
    %v307 = vld [vmem:[#allocation10 + $0x168] sm:$0xff]
    %v308 = vld [vmem:[#allocation10 + $0x170] sm:$0xff]
    %v309 = vld [vmem:[#allocation10 + $0x178] sm:$0xff]
    %v310 = vld [vmem:[%s6] sm:$0x1]
    %v312 = vperm.slane %v310, 0
    %314 = vmatpush.xpose.msra.mxu0 %v307
    %315 = vmatpush.xpose.msra.mxu0 %v304
    %316 = vmatpush.xpose.msra.mxu0 %v301
    %317 = vmatpush.xpose.msra.mxu0 %v298
    %318 = vmatpush.xpose.msra.mxu0 %v295
    %319 = vmatpush.xpose.msra.mxu0 %v292
    %320 = vmatpush.xpose.msra.mxu0 %v289
    %321 = vmatpush.xpose.msra.mxu0 %v286
    %322 = vmatpush.xpose.msra.mxu0 %v283
    %323 = vmatpush.xpose.msra.mxu0 %v280
    %324 = vmatpush.xpose.msra.mxu0 %v277
    %325 = vmatpush.xpose.msra.mxu0 %v274
    %326 = vmatpush.xpose.msra.mxu0 %v271
    %327 = vmatpush.xpose.msra.mxu0 %v268
    %328 = vmatpush.xpose.msra.mxu0 %v265
    %329 = vmatpush.xpose.msra.mxu0 %v262
    %330 = vmatmul.f32.gmra.mxu0 %v259
    %v331 = vpop.f32.mrf.mxu0
    %v332 = vadd.f32 %v312, %v331
    %333 = vdwg.mxu0
    %334 = vmatpush.xpose.msra.mxu0 %v308
    %335 = vmatpush.xpose.msra.mxu0 %v305
    %336 = vmatpush.xpose.msra.mxu0 %v302
    %337 = vmatpush.xpose.msra.mxu0 %v299
    %338 = vmatpush.xpose.msra.mxu0 %v296
    %339 = vmatpush.xpose.msra.mxu0 %v293
    %340 = vmatpush.xpose.msra.mxu0 %v290
    %341 = vmatpush.xpose.msra.mxu0 %v287
    %342 = vmatpush.xpose.msra.mxu0 %v284
    %343 = vmatpush.xpose.msra.mxu0 %v281
    %344 = vmatpush.xpose.msra.mxu0 %v278
    %345 = vmatpush.xpose.msra.mxu0 %v275
    %346 = vmatpush.xpose.msra.mxu0 %v272
    %347 = vmatpush.xpose.msra.mxu0 %v269
    %348 = vmatpush.xpose.msra.mxu0 %v266
    %349 = vmatpush.xpose.msra.mxu0 %v263
    %350 = vmatmul.f32.gmra.mxu0 %v260
    %v351 = vpop.f32.mrf.mxu0
    %v352 = vadd.f32 %v332, %v351
    %353 = vdwg.mxu0
    %354 = vmatpush.xpose.msra.mxu0 %v309
    %355 = vmatpush.xpose.msra.mxu0 %v306
    %356 = vmatpush.xpose.msra.mxu0 %v303
    %357 = vmatpush.xpose.msra.mxu0 %v300
    %358 = vmatpush.xpose.msra.mxu0 %v297
    %359 = vmatpush.xpose.msra.mxu0 %v294
    %360 = vmatpush.xpose.msra.mxu0 %v291
    %361 = vmatpush.xpose.msra.mxu0 %v288
    %362 = vmatpush.xpose.msra.mxu0 %v285
    %363 = vmatpush.xpose.msra.mxu0 %v282
    %364 = vmatpush.xpose.msra.mxu0 %v279
    %365 = vmatpush.xpose.msra.mxu0 %v276
    %366 = vmatpush.xpose.msra.mxu0 %v273
    %367 = vmatpush.xpose.msra.mxu0 %v270
    %368 = vmatpush.xpose.msra.mxu0 %v267
    %369 = vmatpush.xpose.msra.mxu0 %v264
    %370 = vmatmul.f32.gmra.mxu0 %v261
    %v371 = vpop.f32.mrf.mxu0
    %v372 = vadd.f32 %v352, %v371
    %373 = vdwg.mxu0
    %374 = vst [vmem:[#allocation11] sm:$0xff] %v372
    // Predicated region
    $region50: #{tpu_custom_call.1} parent=1 // pred_check
      _
    $region51: #{tpu_custom_call.1} parent=1 // pred_check_branch
      %376 = sbr.rel (0) target = $region53
    $region52: #{tpu_custom_call.1} parent=1 // pred_region
      %378 = vsyncadd [#allocation4], 0
      %s380 = sshll.u32 [#allocation11], 4
      %s381 = int_to_ptr.vmem [resolvable:$true] %s380
      %s382 = sshll.u32 %s7, 4
      %s383 = int_to_ptr.hbm [resolvable:$true] %s382
      %385 = dma.vmem_to_hbm [thread:$0]  %s381, 128, %s383, [#allocation4]
    $region53: #{tpu_custom_call.1} parent=1 // pred_fallthru
      _
    // Predicated region
    $region54: #{tpu_custom_call.1} parent=1 // pred_check
      _
    $region55: #{tpu_custom_call.1} parent=1 // pred_check_branch
      %387 = sbr.rel (0) target = $region57
    $region56: #{tpu_custom_call.1} parent=1 // pred_region
      %389 = dma.done [#allocation4], 128
    $region57: #{tpu_custom_call.1} parent=1 // pred_fallthru
      _
    %390 = vsyncpa [#allocation3], 1
    %391 = vsyncpa [#allocation6], 1
    %392 = vsyncpa [#allocation9], 1
    %393 = vsyncpa [#allocation4], 1

</llo_original>
